<compile_context>
chip_gen: v6e
topology: v6e:2x2x1
jax: 0.10.0
libtpu: 0.0.40
codegen_flags: <defaults>
</compile_context>

<pallas_src>
import functools
import math

import jax
import jax.numpy as jnp
from jax.experimental import pallas as pl
from jax.experimental.pallas import tpu as pltpu

ALPHA = 0.2      # LeakyReLU negative slope
DROPOUT = 0.0    # eval mode: F.dropout(training=False) is the identity

LANE = 128       # vreg lane width
SUB = 8          # vreg sublane count


def _round_up(x, m):
    return (x + m - 1) // m * m


def _leaky(v, alpha=ALPHA):
    return jnp.where(v > 0, v, alpha * v)


# ---------------------------------------------------------------------------
# Kernels
# ---------------------------------------------------------------------------
def fused_heads_kernel(xin_ref, wfc_ref, wq_ref, wkv_ref, aux_ref, hmt_ref,
                       out_ref, *, bp, mp, m_valid, nhp):
    """All heads of TransformerAgg.forward (y given) in one grid-less step.

    xin : [BP + BP*MP, in_pad]  rows [0,BP) are x, rows [BP,..) are y (row-major b,m)
    wfc : [in_pad, NP]          head-concatenated fc weights (zero lane padding)
    wq  : [NP, NP]              block-diag per-head Q, 1/sqrt(H) pre-folded
    wkv : [NP, 2*NP]            block-diag [K | V]
    aux : [AUX_ROWS, NP]        rows [0,NHp): head->lane selector, then bfc,bq,bk,bv
    hmt : [NP, NHp]             head selector, transposed
    out : [BP, NP]
    """
    np_l = out_ref.shape[-1]                 # padded NH*H (multiple of 128)

    aux = aux_ref[...]
    hm = aux[0:nhp, :]                       # [NHp, NP]  (sublane-aligned slice)
    bfc = aux[nhp:nhp + 1, :]
    bq = aux[nhp + 1:nhp + 2, :]             # attention scale already folded in
    bk = aux[nhp + 2:nhp + 3, :]
    bv = aux[nhp + 3:nhp + 4, :]

    # Fused fc + LeakyReLU for x and y in a single lane-dense MXU matmul,
    # split at an 8-row sublane boundary (free).
    fc = _leaky(jnp.dot(xin_ref[...], wfc_ref[...],
                        preferred_element_type=jnp.float32) + bfc)
    xh = fc[:bp, :]                          # [BP, NP]
    yh = fc[bp:, :]                          # [BP*MP, NP]

    # Q on the targets; fused K|V on the neighbors (lane split at 128-aligned NP).
    q = jnp.dot(xh, wq_ref[...], preferred_element_type=jnp.float32) + bq
    kv = jnp.dot(yh, wkv_ref[...], preferred_element_type=jnp.float32)
    k = kv[:, :np_l] + bk
    v = kv[:, np_l:] + bv

    # Per-head scores: elementwise k*q (VPU, sublane-broadcast of q over M),
    # then ONE flat MXU matmul against the transposed head selector.
    k3 = k.reshape(bp, mp, np_l)
    kq = (k3 * q[:, None, :]).reshape(bp * mp, np_l)
    scores = jnp.dot(kq, hmt_ref[...], preferred_element_type=jnp.float32)
    scores3 = scores.reshape(bp, mp, nhp)    # [BP, MP, NHp]

    if mp != m_valid:                        # static branch: mask padded neighbors
        m_idx = jax.lax.broadcasted_iota(jnp.int32, (bp, mp, nhp), 1)
        scores3 = jnp.where(m_idx < m_valid, scores3, -1e30)

    # softmax over the neighbor axis (dim=1); divide -> EUP approx reciprocal
    mx = jnp.max(scores3, axis=1, keepdims=True)
    ex = jnp.exp(scores3 - mx)
    denom = jnp.sum(ex, axis=1, keepdims=True)
    e = ex * pl.reciprocal(denom, approx=True)

    # Broadcast each head's weight across that head's hidden lanes (MXU),
    # then h = sum_m leaky(v * e).  Dropout is identity in eval mode.
    efull = jnp.dot(e.reshape(bp * mp, nhp), hm,
                    preferred_element_type=jnp.float32)          # [BP*MP, NP]
    hsum = jnp.sum(_leaky(v * efull).reshape(bp, mp, np_l), axis=1)

    # out = (x + h) / 2, head-concatenated, one dense [BP, NP] vreg-tiled store.
    out_ref[...] = (xh + hsum) * 0.5


def fc_only_kernel(x_ref, wfc_ref, bfc_ref, out_ref):
    """TransformerLayer.forward with y=None for all heads: leaky(fc(x))."""
    out_ref[...] = _leaky(
        jnp.dot(x_ref[...], wfc_ref[...], preferred_element_type=jnp.float32)
        + bfc_ref[...])


# ---------------------------------------------------------------------------
# Parameters & packing
# ---------------------------------------------------------------------------
def init_params(key, num_heads, in_dim, hidden_dim):
    """Per-head parameters, stacked on a leading head axis.

    Weights are stored as [head, in, out] (pre-transposed vs. PyTorch's
    [out, in]) so kernels compute act @ W + b.
    """
    ks = jax.random.split(key, 8)

    def u(k, shape, fan_in):
        bound = 1.0 / math.sqrt(fan_in)
        return jax.random.uniform(k, shape, jnp.float32, -bound, bound)

    wfc = u(ks[0], (num_heads, in_dim, hidden_dim), in_dim)
    bfc = u(ks[1], (num_heads, 1, hidden_dim), in_dim)
    wq = u(ks[2], (num_heads, hidden_dim, hidden_dim), hidden_dim)
    bq = u(ks[3], (num_heads, 1, hidden_dim), hidden_dim)
    wk = u(ks[4], (num_heads, hidden_dim, hidden_dim), hidden_dim)
    bk = u(ks[5], (num_heads, 1, hidden_dim), hidden_dim)
    wv = u(ks[6], (num_heads, hidden_dim, hidden_dim), hidden_dim)
    bv = u(ks[7], (num_heads, 1, hidden_dim), hidden_dim)
    return (wfc, bfc, wq, bq, wk, bk, wv, bv)


def pack_params(params):
    """Pack per-head params into fused, lane/sublane-dense kernel operands.

    Zero padding is used everywhere so padded lanes stay exactly zero through
    leaky/softmax/head-mask matmuls and cannot leak into real lanes.
    """
    wfc, bfc, wq, bq, wk, bk, wv, bv = params
    num_heads, in_dim, hidden = wfc.shape
    nhh = num_heads * hidden
    np_l = _round_up(nhh, LANE)                  # padded NH*H (lane dim)
    in_pad = _round_up(in_dim, LANE)
    nhp = _round_up(num_heads, SUB)
    scale = 1.0 / math.sqrt(hidden)              # attention scale, folded into Q

    # fc: concat heads on the output axis -> [in_pad, NP]
    wfc_all = jnp.transpose(wfc, (1, 0, 2)).reshape(in_dim, nhh)
    wfc_all = jnp.pad(wfc_all, ((0, in_pad - in_dim), (0, np_l - nhh)))

    eye = jnp.eye(num_heads, dtype=wq.dtype)

    def block_diag_pad(w):                       # [NH,H,H] -> [NP,NP]
        bd = jnp.einsum('hio,hg->higo', w, eye).reshape(nhh, nhh)
        return jnp.pad(bd, ((0, np_l - nhh), (0, np_l - nhh)))

    wq_bd = block_diag_pad(wq * scale)
    wkv_bd = jnp.concatenate([block_diag_pad(wk), block_diag_pad(wv)], axis=1)

    def vec(b):                                  # [NH,1,H] -> zero-padded [NP]
        return jnp.pad(b.reshape(nhh), (0, np_l - nhh))

    # head selector: hm[h, lane] = 1 iff lane belongs to real head h
    lane = jnp.arange(np_l)
    lane_head = jnp.where(lane < nhh, lane // hidden, -1)
    hm = (lane_head[None, :] == jnp.arange(nhp)[:, None]).astype(jnp.float32)
    hmt = hm.T                                   # [NP, NHp]

    # aux = [head_mask ; bfc ; bq*scale ; bk ; bv ; zero rows] -> multiple of 8 rows
    aux = jnp.concatenate(
        [hm, vec(bfc)[None], vec(bq * scale)[None], vec(bk)[None], vec(bv)[None]],
        axis=0)
    aux = jnp.pad(aux, ((0, _round_up(aux.shape[0], SUB) - aux.shape[0]), (0, 0)))

    meta = dict(num_heads=num_heads, in_dim=in_dim, hidden=hidden,
                nhh=nhh, np_l=np_l, in_pad=in_pad, nhp=nhp)
    return (wfc_all, wq_bd, wkv_bd, aux, hmt), meta


# ---------------------------------------------------------------------------
# Wrapper
# ---------------------------------------------------------------------------
def transformer_agg(x, params, y=None):
    """TransformerAgg.forward.  x: [B,1,in_dim], y: [B,M,in_dim] or None."""
    (wfc_all, wq_bd, wkv_bd, aux, hmt), meta = pack_params(params)
    in_dim, nhh = meta['in_dim'], meta['nhh']
    np_l, in_pad, nhp = meta['np_l'], meta['in_pad'], meta['nhp']

    B = x.shape[0]
    bp = _round_up(B, SUB)
    x2 = jnp.pad(x.reshape(B, in_dim).astype(jnp.float32),
                 ((0, bp - B), (0, in_pad - in_dim)))

    vmem = lambda: pl.BlockSpec(memory_space=pltpu.MemorySpace.VMEM)

    if y is None:
        bfc_row = aux[nhp:nhp + 1, :]
        in_b = x2.nbytes + wfc_all.nbytes + bfc_row.nbytes + bp * np_l * 4
        out = pl.pallas_call(
            fc_only_kernel,
            out_shape=jax.ShapeDtypeStruct((bp, np_l), jnp.float32),
            in_specs=[vmem() for _ in range(3)],
            out_specs=vmem(),
            compiler_params=pltpu.CompilerParams(
                vmem_limit_bytes=int(min(max(2 * in_b + (2 << 20), 4 << 20),
                                         48 << 20))),
            cost_estimate=pl.CostEstimate(
                flops=2 * bp * in_pad * np_l, transcendentals=0,
                bytes_accessed=int(in_b)),
        )(x2, wfc_all, bfc_row)
        return out[:B, :nhh].reshape(B, 1, nhh)

    M = y.shape[1]
    mp = _round_up(M, SUB)
    y_pad = jnp.pad(y.astype(jnp.float32),
                    ((0, bp - B), (0, mp - M), (0, in_pad - in_dim)))
    xin = jnp.concatenate([x2, y_pad.reshape(bp * mp, in_pad)], axis=0)

    kernel = functools.partial(fused_heads_kernel, bp=bp, mp=mp, m_valid=M,
                               nhp=nhp)

    bpm = bp * mp
    rows = bp + bpm
    flops = 2 * (rows * in_pad * np_l            # fused fc
                 + bp * np_l * np_l              # Q
                 + bpm * np_l * 2 * np_l         # fused K|V
                 + bpm * np_l * nhp              # per-head scores
                 + bpm * nhp * np_l)             # per-head weight broadcast
    in_bytes = sum(int(a.nbytes) for a in (xin, wfc_all, wq_bd, wkv_bd, aux, hmt))
    out_bytes = bp * np_l * 4
    vmem_limit = int(min(max(2 * (in_bytes + out_bytes) + (2 << 20), 4 << 20),
                         48 << 20))

    # Grid-less single step: all operands fit VMEM at these sizes and the
    # 0.35 us/step grid overhead would dominate.
    # TODO(synk): for large B, add a batch grid axis ("parallel") with constant
    # index_maps on the weights so v7x's second TensorCore gets half the rows.
    out = pl.pallas_call(
        kernel,
        out_shape=jax.ShapeDtypeStruct((bp, np_l), jnp.float32),
        in_specs=[vmem() for _ in range(6)],
        out_specs=vmem(),
        compiler_params=pltpu.CompilerParams(vmem_limit_bytes=vmem_limit),
        cost_estimate=pl.CostEstimate(
            flops=int(flops),
            transcendentals=int(bpm * nhp + bp * nhp),
            bytes_accessed=int(in_bytes + out_bytes)),
    )(xin, wfc_all, wq_bd, wkv_bd, aux, hmt)

    return out[:B, :nhh].reshape(B, 1, nhh)


# ---------------------------------------------------------------------------
# Pure-JAX per-head reference (uses the raw, un-packed parameters)
# ---------------------------------------------------------------------------
def transformer_agg_ref(x, params, y=None):
    wfc, bfc, wq, bq, wk, bk, wv, bv = params
    num_heads, in_dim, hidden = wfc.shape
    B = x.shape[0]
    outs = []
    if y is None:
        for h in range(num_heads):
            xh = _leaky(x.reshape(B, in_dim) @ wfc[h] + bfc[h])
            outs.append(xh.reshape(B, 1, hidden))
        return jnp.concatenate(outs, axis=-1)
    M = y.shape[1]
    for h in range(num_heads):
        xh = _leaky(x.reshape(B, in_dim) @ wfc[h] + bfc[h])
        yh = _leaky(y.reshape(B * M, in_dim) @ wfc[h] + bfc[h])
        q = (xh @ wq[h] + bq[h]).reshape(B, 1, hidden)
        k = (yh @ wk[h] + bk[h]).reshape(B, M, hidden)
        v = (yh @ wv[h] + bv[h]).reshape(B, M, hidden)
        scores = jnp.sum(k * q, axis=-1, keepdims=True) / jnp.sqrt(
            jnp.float32(hidden))
        e = jax.nn.softmax(scores, axis=1)
        hagg = jnp.sum(_leaky(v * e), axis=1)
        outs.append(((xh + hagg) * 0.5).reshape(B, 1, hidden))
    return jnp.concatenate(outs, axis=-1)


if __name__ == "__main__":
    B, M, IN_DIM, HIDDEN, NUM_HEADS = 2, 8, 16, 32, 2

    key = jax.random.PRNGKey(0)
    kx, ky, kp = jax.random.split(key, 3)
    x = jax.random.normal(kx, (B, 1, IN_DIM), jnp.float32)
    y = jax.random.normal(ky, (B, M, IN_DIM), jnp.float32)
    params = init_params(kp, NUM_HEADS, IN_DIM, HIDDEN)

    out = jax.block_until_ready(transformer_agg(x, params, y))
    assert out.shape == (B, 1, NUM_HEADS * HIDDEN), out.shape

    ref = transformer_agg_ref(x, params, y)
    # 2e-3 tolerance: the softmax denominator uses the EUP approximate
    # reciprocal (pl.reciprocal(approx=True)); everything else is f32-exact.
    assert jnp.allclose(out, ref, atol=2e-3, rtol=2e-3), "mismatch vs reference"

    # also exercise the y=None branch (exact f32 math -> tight tolerance)
    out2 = jax.block_until_ready(transformer_agg(x, params, None))
    ref2 = transformer_agg_ref(x, params, None)
    assert out2.shape == (B, 1, NUM_HEADS * HIDDEN)
    assert jnp.allclose(out2, ref2, atol=1e-4, rtol=1e-4), "mismatch (y=None)"

    print("KERNEL_OK")
</pallas_src>

<mosaic_0001>
module attributes {stable_mosaic.version = 11 : i64} {
  func.func @fused_heads_kernel(%arg0: memref<72x128xf32, #tpu.memory_space<vmem>>, %arg1: memref<128x128xf32, #tpu.memory_space<vmem>>, %arg2: memref<128x128xf32, #tpu.memory_space<vmem>>, %arg3: memref<128x256xf32, #tpu.memory_space<vmem>>, %arg4: memref<16x128xf32, #tpu.memory_space<vmem>>, %arg5: memref<128x8xf32, #tpu.memory_space<vmem>>, %arg6: memref<8x128xf32, #tpu.memory_space<vmem>>) attributes {dimension_semantics = [], scalar_prefetch = 0 : i64, scratch_operands = 0 : i64, tpu.core_type = #tpu.core_type<tc>} {
    %c0 = arith.constant 0 : index
    %c0_0 = arith.constant 0 : index
    %0 = vector.load %arg4[%c0, %c0_0] : memref<16x128xf32, #tpu.memory_space<vmem>>, vector<16x128xf32>
    %1 = vector.extract_strided_slice %0 {offsets = [0, 0], sizes = [8, 128], strides = [1, 1]} : vector<16x128xf32> to vector<8x128xf32>
    %2 = vector.extract_strided_slice %0 {offsets = [8, 0], sizes = [1, 128], strides = [1, 1]} : vector<16x128xf32> to vector<1x128xf32>
    %3 = vector.extract_strided_slice %0 {offsets = [9, 0], sizes = [1, 128], strides = [1, 1]} : vector<16x128xf32> to vector<1x128xf32>
    %4 = vector.extract_strided_slice %0 {offsets = [10, 0], sizes = [1, 128], strides = [1, 1]} : vector<16x128xf32> to vector<1x128xf32>
    %5 = vector.extract_strided_slice %0 {offsets = [11, 0], sizes = [1, 128], strides = [1, 1]} : vector<16x128xf32> to vector<1x128xf32>
    %c0_1 = arith.constant 0 : index
    %c0_2 = arith.constant 0 : index
    %6 = vector.load %arg0[%c0_1, %c0_2] : memref<72x128xf32, #tpu.memory_space<vmem>>, vector<72x128xf32>
    %c0_3 = arith.constant 0 : index
    %c0_4 = arith.constant 0 : index
    %7 = vector.load %arg1[%c0_3, %c0_4] : memref<128x128xf32, #tpu.memory_space<vmem>>, vector<128x128xf32>
    %cst = arith.constant dense<0.000000e+00> : vector<72x128xf32>
    %8 = tpu.matmul %6, %7, %cst {dimension_numbers = #tpu.dot_dimension_numbers<[1], [0], [0], [1], [0, 0, 1, 1], [], []>} : vector<72x128xf32>, vector<128x128xf32>, vector<72x128xf32> -> vector<72x128xf32>
    %9 = vector.broadcast %2 : vector<1x128xf32> to vector<72x128xf32>
    %10 = arith.addf %8, %9 : vector<72x128xf32>
    %cst_5 = arith.constant 0.000000e+00 : f32
    %11 = vector.broadcast %cst_5 : f32 to vector<72x128xf32>
    %12 = arith.cmpf ogt, %10, %11 : vector<72x128xf32>
    %cst_6 = arith.constant 2.000000e-01 : f32
    %13 = vector.broadcast %cst_6 : f32 to vector<72x128xf32>
    %14 = arith.mulf %13, %10 : vector<72x128xf32>
    %15 = arith.select %12, %10, %14 : vector<72x128xi1>, vector<72x128xf32>
    %16 = vector.extract_strided_slice %15 {offsets = [0, 0], sizes = [8, 128], strides = [1, 1]} : vector<72x128xf32> to vector<8x128xf32>
    %17 = vector.extract_strided_slice %15 {offsets = [8, 0], sizes = [64, 128], strides = [1, 1]} : vector<72x128xf32> to vector<64x128xf32>
    %c0_7 = arith.constant 0 : index
    %c0_8 = arith.constant 0 : index
    %18 = vector.load %arg2[%c0_7, %c0_8] : memref<128x128xf32, #tpu.memory_space<vmem>>, vector<128x128xf32>
    %cst_9 = arith.constant dense<0.000000e+00> : vector<8x128xf32>
    %19 = tpu.matmul %16, %18, %cst_9 {dimension_numbers = #tpu.dot_dimension_numbers<[1], [0], [0], [1], [0, 0, 1, 1], [], []>} : vector<8x128xf32>, vector<128x128xf32>, vector<8x128xf32> -> vector<8x128xf32>
    %20 = vector.broadcast %3 : vector<1x128xf32> to vector<8x128xf32>
    %21 = arith.addf %19, %20 : vector<8x128xf32>
    %c0_10 = arith.constant 0 : index
    %c0_11 = arith.constant 0 : index
    %22 = vector.load %arg3[%c0_10, %c0_11] : memref<128x256xf32, #tpu.memory_space<vmem>>, vector<128x256xf32>
    %cst_12 = arith.constant dense<0.000000e+00> : vector<64x256xf32>
    %23 = tpu.matmul %17, %22, %cst_12 {dimension_numbers = #tpu.dot_dimension_numbers<[1], [0], [0], [1], [0, 0, 1, 1], [], []>} : vector<64x128xf32>, vector<128x256xf32>, vector<64x256xf32> -> vector<64x256xf32>
    %24 = vector.extract_strided_slice %23 {offsets = [0, 0], sizes = [64, 128], strides = [1, 1]} : vector<64x256xf32> to vector<64x128xf32>
    %25 = vector.broadcast %4 : vector<1x128xf32> to vector<64x128xf32>
    %26 = arith.addf %24, %25 : vector<64x128xf32>
    %27 = vector.extract_strided_slice %23 {offsets = [0, 128], sizes = [64, 128], strides = [1, 1]} : vector<64x256xf32> to vector<64x128xf32>
    %28 = vector.broadcast %5 : vector<1x128xf32> to vector<64x128xf32>
    %29 = arith.addf %27, %28 : vector<64x128xf32>
    %30 = vector.shape_cast %26 : vector<64x128xf32> to vector<8x8x128xf32>
    %31 = vector.shape_cast %21 : vector<8x128xf32> to vector<8x1x128xf32>
    %32 = vector.broadcast %31 : vector<8x1x128xf32> to vector<8x8x128xf32>
    %33 = arith.mulf %30, %32 : vector<8x8x128xf32>
    %34 = vector.shape_cast %33 : vector<8x8x128xf32> to vector<64x128xf32>
    %c0_13 = arith.constant 0 : index
    %c0_14 = arith.constant 0 : index
    %35 = vector.load %arg5[%c0_13, %c0_14] : memref<128x8xf32, #tpu.memory_space<vmem>>, vector<128x8xf32>
    %cst_15 = arith.constant dense<0.000000e+00> : vector<64x8xf32>
    %36 = tpu.matmul %34, %35, %cst_15 {dimension_numbers = #tpu.dot_dimension_numbers<[1], [0], [0], [1], [0, 0, 1, 1], [], []>} : vector<64x128xf32>, vector<128x8xf32>, vector<64x8xf32> -> vector<64x8xf32>
    %37 = vector.shape_cast %36 : vector<64x8xf32> to vector<8x8x8xf32>
    %cst_16 = arith.constant dense<0xFF800000> : vector<8x8xf32>
    %38 = vector.multi_reduction <maximumf>, %37, %cst_16 [1] : vector<8x8x8xf32> to vector<8x8xf32>
    %39 = vector.shape_cast %38 : vector<8x8xf32> to vector<8x1x8xf32>
    %40 = vector.broadcast %39 : vector<8x1x8xf32> to vector<8x8x8xf32>
    %41 = arith.subf %37, %40 : vector<8x8x8xf32>
    %42 = math.exp %41 : vector<8x8x8xf32>
    %cst_17 = arith.constant dense<0.000000e+00> : vector<8x8xf32>
    %43 = vector.multi_reduction <add>, %42, %cst_17 [1] : vector<8x8x8xf32> to vector<8x8xf32>
    %44 = vector.shape_cast %43 : vector<8x8xf32> to vector<8x1x8xf32>
    %45 = tpu.reciprocal %44 {approx = true} : vector<8x1x8xf32> -> vector<8x1x8xf32>
    %46 = vector.broadcast %45 : vector<8x1x8xf32> to vector<8x8x8xf32>
    %47 = arith.mulf %42, %46 : vector<8x8x8xf32>
    %48 = vector.shape_cast %47 : vector<8x8x8xf32> to vector<64x8xf32>
    %cst_18 = arith.constant dense<0.000000e+00> : vector<64x128xf32>
    %49 = tpu.matmul %48, %1, %cst_18 {dimension_numbers = #tpu.dot_dimension_numbers<[1], [0], [0], [1], [0, 0, 1, 1], [], []>} : vector<64x8xf32>, vector<8x128xf32>, vector<64x128xf32> -> vector<64x128xf32>
    %50 = arith.mulf %29, %49 : vector<64x128xf32>
    %cst_19 = arith.constant 0.000000e+00 : f32
    %51 = vector.broadcast %cst_19 : f32 to vector<64x128xf32>
    %52 = arith.cmpf ogt, %50, %51 : vector<64x128xf32>
    %cst_20 = arith.constant 2.000000e-01 : f32
    %53 = vector.broadcast %cst_20 : f32 to vector<64x128xf32>
    %54 = arith.mulf %53, %50 : vector<64x128xf32>
    %55 = arith.select %52, %50, %54 : vector<64x128xi1>, vector<64x128xf32>
    %56 = vector.shape_cast %55 : vector<64x128xf32> to vector<8x8x128xf32>
    %cst_21 = arith.constant dense<0.000000e+00> : vector<8x128xf32>
    %57 = vector.multi_reduction <add>, %56, %cst_21 [1] : vector<8x8x128xf32> to vector<8x128xf32>
    %58 = arith.addf %16, %57 : vector<8x128xf32>
    %cst_22 = arith.constant 5.000000e-01 : f32
    %59 = vector.broadcast %cst_22 : f32 to vector<8x128xf32>
    %60 = arith.mulf %58, %59 : vector<8x128xf32>
    %c0_23 = arith.constant 0 : index
    %c0_24 = arith.constant 0 : index
    %61 = vector.load %arg6[%c0_23, %c0_24] : memref<8x128xf32, #tpu.memory_space<vmem>>, vector<8x128xf32>
    tpu.vector_store %arg6[%c0_23, %c0_24], %60 {strides = array<i32>} : memref<8x128xf32, #tpu.memory_space<vmem>>, vector<8x128xf32>,
    return
  }
}

</mosaic_0001>

<llo_original>
// kernel: tpu_custom_call.1
$region0: #{tpu_custom_call.1}
  #allocation0 [shape = 'u32[]', space=smem, size = 0x4, offset = 0x4, fixed_abs, tag = 'smem constant byte address 0x4 - core index']
  #allocation1 [shape = 'u32[144,128]{1,0:T(1,128)}', space=vmem, size = 0x12000, scoped, tag = 'internal scratch']
  %s0 = inlined_call_operand.hbm [shape: f32[72,128], index: 0, kind: input, shape index: {}]
  %s1 = inlined_call_operand.vmem [shape: f32[128,128], index: 1, kind: input, shape index: {}]
  %s2 = inlined_call_operand.hbm [shape: f32[128,128], index: 2, kind: input, shape index: {}]
  %s3 = inlined_call_operand.hbm [shape: f32[128,256], index: 3, kind: input, shape index: {}]
  %s4 = inlined_call_operand.hbm [shape: f32[16,128], index: 4, kind: input, shape index: {}]
  %s5 = inlined_call_operand.vmem [shape: f32[128,8], index: 5, kind: input, shape index: {}]
  %s6 = inlined_call_operand.hbm [shape: f32[8,128], index: 6, kind: output, shape index: {}]
  %s7 = sld [smem:[#allocation0]]
  $region50: #{tpu_custom_call.1} parent=0
    _
  %s9 = ssub.s32 1, %s7
  %s10 = scalar_select 0, %s9, %s7
  $region1: #{tpu_custom_call.1} parent=0
    #allocation2 [shape = 'u8[36864]{0}', space=vmem, size = 0x9000, scoped, tag = 'input window, operand 0, single buffered']
    #allocation3 [shape = 's32[1]{0}', space=sflag, size = 0x4, scoped, tag = 'scoped memory for tpu_custom_call.1']
    #allocation4 [shape = 's32[1]{0}', space=sflag, size = 0x4, scoped, tag = 'scoped memory for tpu_custom_call.1']
    #allocation5 [shape = 'u8[65536]{0}', space=vmem, size = 0x10000, scoped, tag = 'input window, operand 2, single buffered']
    #allocation6 [shape = 's32[1]{0}', space=sflag, size = 0x4, scoped, tag = 'scoped memory for tpu_custom_call.1']
    #allocation7 [shape = 'u8[131072]{0}', space=vmem, size = 0x20000, scoped, tag = 'input window, operand 3, single buffered']
    #allocation8 [shape = 'u8[8192]{0}', space=vmem, size = 0x2000, scoped, tag = 'input window, operand 4, single buffered']
    #allocation9 [shape = 's32[1]{0}', space=sflag, size = 0x4, scoped, tag = 'scoped memory for tpu_custom_call.1']
    #allocation10 [shape = 'u8[4096]{0}', space=vmem, size = 0x1000, scoped, tag = 'output window, operand 0, single buffered']
    %11 = vsyncpa [#allocation3], 0
    %12 = vsyncpa [#allocation6], 0
    %13 = vsyncpa [#allocation9], 0
    %14 = vsyncpa [#allocation4], 0
    // Predicated region
    $region2: #{tpu_custom_call.1} parent=1 // pred_check
      _
    $region3: #{tpu_custom_call.1} parent=1 // pred_check_branch
      %16 = sbr.rel (0) target = $region5
    $region4: #{tpu_custom_call.1} parent=1 // pred_region
      %s18 = ssub.s32 1152, 1152
      %19 = vsyncadd [#allocation3], %s18
      %s20 = sshll.u32 [#allocation2], 4
      %s21 = int_to_ptr.vmem [resolvable:$true] %s20
      %26 = dma.hbm_to_vmem [thread:$0]  %s0, 1152, %s21, [#allocation3], 128, 128, 8
    $region5: #{tpu_custom_call.1} parent=1 // pred_fallthru
      _
    // Predicated region
    $region6: #{tpu_custom_call.1} parent=1 // pred_check
      _
    $region7: #{tpu_custom_call.1} parent=1 // pred_check_branch
      %28 = sbr.rel (0) target = $region9
    $region8: #{tpu_custom_call.1} parent=1 // pred_region
      _
    $region9: #{tpu_custom_call.1} parent=1 // pred_fallthru
      _
    // Predicated region
    $region10: #{tpu_custom_call.1} parent=1 // pred_check
      _
    $region11: #{tpu_custom_call.1} parent=1 // pred_check_branch
      %30 = sbr.rel (0) target = $region13
    $region12: #{tpu_custom_call.1} parent=1 // pred_region
      %s32 = ssub.s32 2048, 2048
      %33 = vsyncadd [#allocation6], %s32
      %s34 = sshll.u32 [#allocation5], 4
      %s35 = int_to_ptr.vmem [resolvable:$true] %s34
      %40 = dma.hbm_to_vmem [thread:$0]  %s2, 2048, %s35, [#allocation6], 128, 128, 8
    $region13: #{tpu_custom_call.1} parent=1 // pred_fallthru
      _
    // Predicated region
    $region14: #{tpu_custom_call.1} parent=1 // pred_check
      _
    $region15: #{tpu_custom_call.1} parent=1 // pred_check_branch
      %42 = sbr.rel (0) target = $region17
    $region16: #{tpu_custom_call.1} parent=1 // pred_region
      %s44 = ssub.s32 4096, 4096
      %45 = vsyncadd [#allocation6], %s44
      %s46 = sshll.u32 [#allocation7], 4
      %s47 = int_to_ptr.vmem [resolvable:$true] %s46
      %52 = dma.hbm_to_vmem [thread:$0]  %s3, 4096, %s47, [#allocation6], 256, 256, 16
    $region17: #{tpu_custom_call.1} parent=1 // pred_fallthru
      _
    // Predicated region
    $region18: #{tpu_custom_call.1} parent=1 // pred_check
      _
    $region19: #{tpu_custom_call.1} parent=1 // pred_check_branch
      %54 = sbr.rel (0) target = $region21
    $region20: #{tpu_custom_call.1} parent=1 // pred_region
      %s56 = ssub.s32 256, 256
      %57 = vsyncadd [#allocation9], %s56
      %s58 = sshll.u32 [#allocation8], 4
      %s59 = int_to_ptr.vmem [resolvable:$true] %s58
      %64 = dma.hbm_to_vmem [thread:$0]  %s4, 256, %s59, [#allocation9], 128, 128, 8
    $region21: #{tpu_custom_call.1} parent=1 // pred_fallthru
      _
    // Predicated region
    $region22: #{tpu_custom_call.1} parent=1 // pred_check
      _
    $region23: #{tpu_custom_call.1} parent=1 // pred_check_branch
      %66 = sbr.rel (0) target = $region25
    $region24: #{tpu_custom_call.1} parent=1 // pred_region
      _
    $region25: #{tpu_custom_call.1} parent=1 // pred_fallthru
      _
    // Predicated region
    $region26: #{tpu_custom_call.1} parent=1 // pred_check
      _
    $region27: #{tpu_custom_call.1} parent=1 // pred_check_branch
      %68 = sbr.rel (0) target = $region29
    $region28: #{tpu_custom_call.1} parent=1 // pred_region
      %69 = dma.done [#allocation3], 1152
    $region29: #{tpu_custom_call.1} parent=1 // pred_fallthru
      _
    // Predicated region
    $region30: #{tpu_custom_call.1} parent=1 // pred_check
      _
    $region31: #{tpu_custom_call.1} parent=1 // pred_check_branch
      %71 = sbr.rel (0) target = $region33
    $region32: #{tpu_custom_call.1} parent=1 // pred_region
      %72 = dma.done [#allocation6], 2048
    $region33: #{tpu_custom_call.1} parent=1 // pred_fallthru
      _
    // Predicated region
    $region34: #{tpu_custom_call.1} parent=1 // pred_check
      _
    $region35: #{tpu_custom_call.1} parent=1 // pred_check_branch
      %74 = sbr.rel (0) target = $region37
    $region36: #{tpu_custom_call.1} parent=1 // pred_region
      %75 = dma.done [#allocation6], 4096
    $region37: #{tpu_custom_call.1} parent=1 // pred_fallthru
      _
    // Predicated region
    $region38: #{tpu_custom_call.1} parent=1 // pred_check
      _
    $region39: #{tpu_custom_call.1} parent=1 // pred_check_branch
      %77 = sbr.rel (0) target = $region41
    $region40: #{tpu_custom_call.1} parent=1 // pred_region
      %78 = dma.done [#allocation9], 256
    $region41: #{tpu_custom_call.1} parent=1 // pred_fallthru
      _
    %v79 = vld [vmem:[#allocation8] sm:$0xff]
    %v80 = vld [vmem:[#allocation8 + $0x8] sm:$0xff]
    %v81 = vld [vmem:[#allocation2] sm:$0xff]
    %v82 = vld [vmem:[#allocation2 + $0x8] sm:$0xff]
    %v83 = vld [vmem:[#allocation2 + $0x10] sm:$0xff]
    %v84 = vld [vmem:[#allocation2 + $0x18] sm:$0xff]
    %v85 = vld [vmem:[#allocation2 + $0x20] sm:$0xff]
    %v86 = vld [vmem:[#allocation2 + $0x28] sm:$0xff]
    %v87 = vld [vmem:[#allocation2 + $0x30] sm:$0xff]
    %v88 = vld [vmem:[#allocation2 + $0x38] sm:$0xff]
    %v89 = vld [vmem:[#allocation2 + $0x40] sm:$0xff]
    %v90 = vld [vmem:[%s1] sm:$0xff]
    %v91 = vld [vmem:[%s1 + $0x8] sm:$0xff]
    %v92 = vld [vmem:[%s1 + $0x10] sm:$0xff]
    %v93 = vld [vmem:[%s1 + $0x18] sm:$0xff]
    %v94 = vld [vmem:[%s1 + $0x20] sm:$0xff]
    %v95 = vld [vmem:[%s1 + $0x28] sm:$0xff]
    %v96 = vld [vmem:[%s1 + $0x30] sm:$0xff]
    %v97 = vld [vmem:[%s1 + $0x38] sm:$0xff]
    %v98 = vld [vmem:[%s1 + $0x40] sm:$0xff]
    %v99 = vld [vmem:[%s1 + $0x48] sm:$0xff]
    %v100 = vld [vmem:[%s1 + $0x50] sm:$0xff]
    %v101 = vld [vmem:[%s1 + $0x58] sm:$0xff]
    %v102 = vld [vmem:[%s1 + $0x60] sm:$0xff]
    %v103 = vld [vmem:[%s1 + $0x68] sm:$0xff]
    %v104 = vld [vmem:[%s1 + $0x70] sm:$0xff]
    %v105 = vld [vmem:[%s1 + $0x78] sm:$0xff]
    %v106 = vlaneseq
    %v107 = vshrl.u32 %v106, 7
    %v108 = vsub.s32 0, %v107
    %v109 = vrot.slane %v80, %v108
    %110 = vmatprep.subr.mxu0 0.0
    %111 = vmatpush1.msra.mxu0 %v105
    %112 = vmatprep.subr.mxu0 0.0
    %113 = vmatpush1.msra.mxu0 %v104
    %114 = vmatprep.subr.mxu0 0.0
    %115 = vmatpush1.msra.mxu0 %v103
    %116 = vmatprep.subr.mxu0 0.0
    %117 = vmatpush1.msra.mxu0 %v102
    %118 = vmatprep.subr.mxu0 0.0
    %119 = vmatpush1.msra.mxu0 %v101
    %120 = vmatprep.subr.mxu0 0.0
    %121 = vmatpush1.msra.mxu0 %v100
    %122 = vmatprep.subr.mxu0 0.0
    %123 = vmatpush1.msra.mxu0 %v99
    %124 = vmatprep.subr.mxu0 0.0
    %125 = vmatpush1.msra.mxu0 %v98
    %126 = vmatprep.subr.mxu0 0.0
    %127 = vmatpush1.msra.mxu0 %v97
    %128 = vmatprep.subr.mxu0 0.0
    %129 = vmatpush1.msra.mxu0 %v96
    %130 = vmatprep.subr.mxu0 0.0
    %131 = vmatpush1.msra.mxu0 %v95
    %132 = vmatprep.subr.mxu0 0.0
    %133 = vmatpush1.msra.mxu0 %v94
    %134 = vmatprep.subr.mxu0 0.0
    %135 = vmatpush1.msra.mxu0 %v93
    %136 = vmatprep.subr.mxu0 0.0
    %137 = vmatpush1.msra.mxu0 %v92
    %138 = vmatprep.subr.mxu0 0.0
    %139 = vmatpush1.msra.mxu0 %v91
    %140 = vmatprep.subr.mxu0 0.0
    %141 = vmatpush1.msra.mxu0 %v90
    %142 = vmatprep.subr.mxu0 0.0
    %143 = vmatpush2.msra.mxu0 0.0
    %144 = vmatprep.subr.mxu0 0.0
    %145 = vmatpush2.msra.mxu0 0.0
    %146 = vmatprep.subr.mxu0 0.0
    %147 = vmatpush2.msra.mxu0 0.0
    %148 = vmatprep.subr.mxu0 0.0
    %149 = vmatpush2.msra.mxu0 0.0
    %150 = vmatprep.subr.mxu0 0.0
    %151 = vmatpush2.msra.mxu0 0.0
    %152 = vmatprep.subr.mxu0 0.0
    %153 = vmatpush2.msra.mxu0 0.0
    %154 = vmatprep.subr.mxu0 0.0
    %155 = vmatpush2.msra.mxu0 0.0
    %156 = vmatprep.subr.mxu0 0.0
    %157 = vmatpush2.msra.mxu0 0.0
    %158 = vmatprep.subr.mxu0 0.0
    %159 = vmatpush2.msra.mxu0 0.0
    %160 = vmatprep.subr.mxu0 0.0
    %161 = vmatpush2.msra.mxu0 0.0
    %162 = vmatprep.subr.mxu0 0.0
    %163 = vmatpush2.msra.mxu0 0.0
    %164 = vmatprep.subr.mxu0 0.0
    %165 = vmatpush2.msra.mxu0 0.0
    %166 = vmatprep.subr.mxu0 0.0
    %167 = vmatpush2.msra.mxu0 0.0
    %168 = vmatprep.subr.mxu0 0.0
    %169 = vmatpush2.msra.mxu0 0.0
    %170 = vmatprep.subr.mxu0 0.0
    %171 = vmatpush2.msra.mxu0 0.0
    %172 = vmatprep.subr.mxu0 0.0
    %173 = vmatpush2.msra.mxu0 0.0
    %174 = vmatprep.mubr.f32.mxu0 0.0
    %175 = vmatmul.mubr.f32.gmra.mxu0 %v81
    %v176 = vpop.f32.mrf.mxu0
    %v177 = vadd.f32 %v109, %v176
    %v178 = vpop.f32.mrf.mxu0
    %179 = vmatprep.mubr.f32.mxu0 0.0
    %180 = vmatmul.mubr.f32.gmra.mxu0 %v82
    %v181 = vpop.f32.mrf.mxu0
    %v182 = vadd.f32 %v109, %v181
    %v183 = vpop.f32.mrf.mxu0
    %184 = vmatprep.mubr.f32.mxu0 0.0
    %185 = vmatmul.mubr.f32.gmra.mxu0 %v83
    %v186 = vpop.f32.mrf.mxu0
    %v187 = vadd.f32 %v109, %v186
    %v188 = vpop.f32.mrf.mxu0
    %189 = vmatprep.mubr.f32.mxu0 0.0
    %190 = vmatmul.mubr.f32.gmra.mxu0 %v84
    %v191 = vpop.f32.mrf.mxu0
    %v192 = vadd.f32 %v109, %v191
    %v193 = vpop.f32.mrf.mxu0
    %194 = vmatprep.mubr.f32.mxu0 0.0
    %195 = vmatmul.mubr.f32.gmra.mxu0 %v85
    %v196 = vpop.f32.mrf.mxu0
    %v197 = vadd.f32 %v109, %v196
    %v198 = vpop.f32.mrf.mxu0
    %199 = vmatprep.mubr.f32.mxu0 0.0
    %200 = vmatmul.mubr.f32.gmra.mxu0 %v86
    %v201 = vpop.f32.mrf.mxu0
    %v202 = vadd.f32 %v109, %v201
    %v203 = vpop.f32.mrf.mxu0
    %204 = vmatprep.mubr.f32.mxu0 0.0
    %205 = vmatmul.mubr.f32.gmra.mxu0 %v87
    %v206 = vpop.f32.mrf.mxu0
    %v207 = vadd.f32 %v109, %v206
    %v208 = vpop.f32.mrf.mxu0
    %209 = vmatprep.mubr.f32.mxu0 0.0
    %210 = vmatmul.mubr.f32.gmra.mxu0 %v88
    %v211 = vpop.f32.mrf.mxu0
    %v212 = vadd.f32 %v109, %v211
    %v213 = vpop.f32.mrf.mxu0
    %214 = vmatprep.mubr.f32.mxu0 0.0
    %215 = vmatmul.mubr.f32.gmra.mxu0 %v89
    %v216 = vpop.f32.mrf.mxu0
    %v217 = vadd.f32 %v109, %v216
    %v218 = vpop.f32.mrf.mxu0
    %219 = vdwg.mxu0
    %vm220 = vcmp.gt.f32.partialorder %v177, 0.0
    %vm221 = vcmp.gt.f32.partialorder %v182, 0.0
    %vm222 = vcmp.gt.f32.partialorder %v187, 0.0
    %vm223 = vcmp.gt.f32.partialorder %v192, 0.0
    %vm224 = vcmp.gt.f32.partialorder %v197, 0.0
    %vm225 = vcmp.gt.f32.partialorder %v202, 0.0
    %vm226 = vcmp.gt.f32.partialorder %v207, 0.0
    %vm227 = vcmp.gt.f32.partialorder %v212, 0.0
    %vm228 = vcmp.gt.f32.partialorder %v217, 0.0
    %v229 = vmul.f32 %v177, 0.2
    %v230 = vmul.f32 %v182, 0.2
    %v231 = vmul.f32 %v187, 0.2
    %v232 = vmul.f32 %v192, 0.2
    %v233 = vmul.f32 %v197, 0.2
    %v234 = vmul.f32 %v202, 0.2
    %v235 = vmul.f32 %v207, 0.2
    %v236 = vmul.f32 %v212, 0.2
    %v237 = vmul.f32 %v217, 0.2
    %v238 = vsel %vm220, %v177, %v229
    %v239 = vsel %vm221, %v182, %v230
    %v240 = vsel %vm222, %v187, %v231
    %v241 = vsel %vm223, %v192, %v232
    %v242 = vsel %vm224, %v197, %v233
    %v243 = vsel %vm225, %v202, %v234
    %v244 = vsel %vm226, %v207, %v235
    %v245 = vsel %vm227, %v212, %v236
    %v246 = vsel %vm228, %v217, %v237
    %v247 = vld [vmem:[#allocation5] sm:$0xff]
    %v248 = vld [vmem:[#allocation5 + $0x8] sm:$0xff]
    %v249 = vld [vmem:[#allocation5 + $0x10] sm:$0xff]
    %v250 = vld [vmem:[#allocation5 + $0x18] sm:$0xff]
    %v251 = vld [vmem:[#allocation5 + $0x20] sm:$0xff]
    %v252 = vld [vmem:[#allocation5 + $0x28] sm:$0xff]
    %v253 = vld [vmem:[#allocation5 + $0x30] sm:$0xff]
    %v254 = vld [vmem:[#allocation5 + $0x38] sm:$0xff]
    %v255 = vld [vmem:[#allocation5 + $0x40] sm:$0xff]
    %v256 = vld [vmem:[#allocation5 + $0x48] sm:$0xff]
    %v257 = vld [vmem:[#allocation5 + $0x50] sm:$0xff]
    %v258 = vld [vmem:[#allocation5 + $0x58] sm:$0xff]
    %v259 = vld [vmem:[#allocation5 + $0x60] sm:$0xff]
    %v260 = vld [vmem:[#allocation5 + $0x68] sm:$0xff]
    %v261 = vld [vmem:[#allocation5 + $0x70] sm:$0xff]
    %v262 = vld [vmem:[#allocation5 + $0x78] sm:$0xff]
    %v263 = vlaneseq
    %v264 = vshrl.u32 %v263, 7
    %v265 = vsub.s32 1, %v264
    %v266 = vrot.slane %v80, %v265
    %267 = vmatprep.subr.mxu0 0.0
    %268 = vmatpush1.msra.mxu0 %v262
    %269 = vmatprep.subr.mxu0 0.0
    %270 = vmatpush1.msra.mxu0 %v261
    %271 = vmatprep.subr.mxu0 0.0
    %272 = vmatpush1.msra.mxu0 %v260
    %273 = vmatprep.subr.mxu0 0.0
    %274 = vmatpush1.msra.mxu0 %v259
    %275 = vmatprep.subr.mxu0 0.0
    %276 = vmatpush1.msra.mxu0 %v258
    %277 = vmatprep.subr.mxu0 0.0
    %278 = vmatpush1.msra.mxu0 %v257
    %279 = vmatprep.subr.mxu0 0.0
    %280 = vmatpush1.msra.mxu0 %v256
    %281 = vmatprep.subr.mxu0 0.0
    %282 = vmatpush1.msra.mxu0 %v255
    %283 = vmatprep.subr.mxu0 0.0
    %284 = vmatpush1.msra.mxu0 %v254
    %285 = vmatprep.subr.mxu0 0.0
    %286 = vmatpush1.msra.mxu0 %v253
    %287 = vmatprep.subr.mxu0 0.0
    %288 = vmatpush1.msra.mxu0 %v252
    %289 = vmatprep.subr.mxu0 0.0
    %290 = vmatpush1.msra.mxu0 %v251
    %291 = vmatprep.subr.mxu0 0.0
    %292 = vmatpush1.msra.mxu0 %v250
    %293 = vmatprep.subr.mxu0 0.0
    %294 = vmatpush1.msra.mxu0 %v249
    %295 = vmatprep.subr.mxu0 0.0
    %296 = vmatpush1.msra.mxu0 %v248
    %297 = vmatprep.subr.mxu0 0.0
    %298 = vmatpush1.msra.mxu0 %v247
    %299 = vmatprep.subr.mxu0 0.0
    %300 = vmatpush2.msra.mxu0 0.0
    %301 = vmatprep.subr.mxu0 0.0
    %302 = vmatpush2.msra.mxu0 0.0
    %303 = vmatprep.subr.mxu0 0.0
    %304 = vmatpush2.msra.mxu0 0.0
    %305 = vmatprep.subr.mxu0 0.0
    %306 = vmatpush2.msra.mxu0 0.0
    %307 = vmatprep.subr.mxu0 0.0
    %308 = vmatpush2.msra.mxu0 0.0
    %309 = vmatprep.subr.mxu0 0.0
    %310 = vmatpush2.msra.mxu0 0.0
    %311 = vmatprep.subr.mxu0 0.0
    %312 = vmatpush2.msra.mxu0 0.0
    %313 = vmatprep.subr.mxu0 0.0
    %314 = vmatpush2.msra.mxu0 0.0
    %315 = vmatprep.subr.mxu0 0.0
    %316 = vmatpush2.msra.mxu0 0.0
    %317 = vmatprep.subr.mxu0 0.0
    %318 = vmatpush2.msra.mxu0 0.0
    %319 = vmatprep.subr.mxu0 0.0
    %320 = vmatpush2.msra.mxu0 0.0
    %321 = vmatprep.subr.mxu0 0.0
    %322 = vmatpush2.msra.mxu0 0.0
    %323 = vmatprep.subr.mxu0 0.0
    %324 = vmatpush2.msra.mxu0 0.0
    %325 = vmatprep.subr.mxu0 0.0
    %326 = vmatpush2.msra.mxu0 0.0
    %327 = vmatprep.subr.mxu0 0.0
    %328 = vmatpush2.msra.mxu0 0.0
    %329 = vmatprep.subr.mxu0 0.0
    %330 = vmatpush2.msra.mxu0 0.0
    %331 = vmatprep.mubr.f32.mxu0 0.0
    %332 = vmatmul.mubr.f32.gmra.mxu0 %v238
    %v333 = vpop.f32.mrf.mxu0
    %v334 = vadd.f32 %v266, %v333
    %v335 = vpop.f32.mrf.mxu0
    %336 = vdwg.mxu0
    %v337 = vld [vmem:[#allocation7] sm:$0xff]
    %v338 = vld [vmem:[#allocation7 + $0x8] sm:$0xff]
    %v339 = vld [vmem:[#allocation7 + $0x10] sm:$0xff]
    %v340 = vld [vmem:[#allocation7 + $0x18] sm:$0xff]
    %v341 = vld [vmem:[#allocation7 + $0x20] sm:$0xff]
    %v342 = vld [vmem:[#allocation7 + $0x28] sm:$0xff]
    %v343 = vld [vmem:[#allocation7 + $0x30] sm:$0xff]
    %v344 = vld [vmem:[#allocation7 + $0x38] sm:$0xff]
    %v345 = vld [vmem:[#allocation7 + $0x40] sm:$0xff]
    %v346 = vld [vmem:[#allocation7 + $0x48] sm:$0xff]
    %v347 = vld [vmem:[#allocation7 + $0x50] sm:$0xff]
    %v348 = vld [vmem:[#allocation7 + $0x58] sm:$0xff]
    %v349 = vld [vmem:[#allocation7 + $0x60] sm:$0xff]
    %v350 = vld [vmem:[#allocation7 + $0x68] sm:$0xff]
    %v351 = vld [vmem:[#allocation7 + $0x70] sm:$0xff]
    %v352 = vld [vmem:[#allocation7 + $0x78] sm:$0xff]
    %v353 = vld [vmem:[#allocation7 + $0x80] sm:$0xff]
    %v354 = vld [vmem:[#allocation7 + $0x88] sm:$0xff]
    %v355 = vld [vmem:[#allocation7 + $0x90] sm:$0xff]
    %v356 = vld [vmem:[#allocation7 + $0x98] sm:$0xff]
    %v357 = vld [vmem:[#allocation7 + $0xa0] sm:$0xff]
    %v358 = vld [vmem:[#allocation7 + $0xa8] sm:$0xff]
    %v359 = vld [vmem:[#allocation7 + $0xb0] sm:$0xff]
    %v360 = vld [vmem:[#allocation7 + $0xb8] sm:$0xff]
    %v361 = vld [vmem:[#allocation7 + $0xc0] sm:$0xff]
    %v362 = vld [vmem:[#allocation7 + $0xc8] sm:$0xff]
    %v363 = vld [vmem:[#allocation7 + $0xd0] sm:$0xff]
    %v364 = vld [vmem:[#allocation7 + $0xd8] sm:$0xff]
    %v365 = vld [vmem:[#allocation7 + $0xe0] sm:$0xff]
    %v366 = vld [vmem:[#allocation7 + $0xe8] sm:$0xff]
    %v367 = vld [vmem:[#allocation7 + $0xf0] sm:$0xff]
    %v368 = vld [vmem:[#allocation7 + $0xf8] sm:$0xff]
    %369 = vmatprep.subr.mxu0 %v368
    %370 = vmatpush1.msra.mxu0 %v367
    %371 = vmatprep.subr.mxu0 %v366
    %372 = vmatpush1.msra.mxu0 %v365
    %373 = vmatprep.subr.mxu0 %v364
    %374 = vmatpush1.msra.mxu0 %v363
    %375 = vmatprep.subr.mxu0 %v362
    %376 = vmatpush1.msra.mxu0 %v361
    %377 = vmatprep.subr.mxu0 %v360
    %378 = vmatpush1.msra.mxu0 %v359
    %379 = vmatprep.subr.mxu0 %v358
    %380 = vmatpush1.msra.mxu0 %v357
    %381 = vmatprep.subr.mxu0 %v356
    %382 = vmatpush1.msra.mxu0 %v355
    %383 = vmatprep.subr.mxu0 %v354
    %384 = vmatpush1.msra.mxu0 %v353
    %385 = vmatprep.subr.mxu0 %v352
    %386 = vmatpush1.msra.mxu0 %v351
    %387 = vmatprep.subr.mxu0 %v350
    %388 = vmatpush1.msra.mxu0 %v349
    %389 = vmatprep.subr.mxu0 %v348
    %390 = vmatpush1.msra.mxu0 %v347
    %391 = vmatprep.subr.mxu0 %v346
    %392 = vmatpush1.msra.mxu0 %v345
    %393 = vmatprep.subr.mxu0 %v344
    %394 = vmatpush1.msra.mxu0 %v343
    %395 = vmatprep.subr.mxu0 %v342
    %396 = vmatpush1.msra.mxu0 %v341
    %397 = vmatprep.subr.mxu0 %v340
    %398 = vmatpush1.msra.mxu0 %v339
    %399 = vmatprep.subr.mxu0 %v338
    %400 = vmatpush1.msra.mxu0 %v337
    %401 = vmatprep.subr.mxu0 0.0
    %402 = vmatpush2.msra.mxu0 0.0
    %403 = vmatprep.subr.mxu0 0.0
    %404 = vmatpush2.msra.mxu0 0.0
    %405 = vmatprep.subr.mxu0 0.0
    %406 = vmatpush2.msra.mxu0 0.0
    %407 = vmatprep.subr.mxu0 0.0
    %408 = vmatpush2.msra.mxu0 0.0
    %409 = vmatprep.subr.mxu0 0.0
    %410 = vmatpush2.msra.mxu0 0.0
    %411 = vmatprep.subr.mxu0 0.0
    %412 = vmatpush2.msra.mxu0 0.0
    %413 = vmatprep.subr.mxu0 0.0
    %414 = vmatpush2.msra.mxu0 0.0
    %415 = vmatprep.subr.mxu0 0.0
    %416 = vmatpush2.msra.mxu0 0.0
    %417 = vmatprep.subr.mxu0 0.0
    %418 = vmatpush2.msra.mxu0 0.0
    %419 = vmatprep.subr.mxu0 0.0
    %420 = vmatpush2.msra.mxu0 0.0
    %421 = vmatprep.subr.mxu0 0.0
    %422 = vmatpush2.msra.mxu0 0.0
    %423 = vmatprep.subr.mxu0 0.0
    %424 = vmatpush2.msra.mxu0 0.0
    %425 = vmatprep.subr.mxu0 0.0
    %426 = vmatpush2.msra.mxu0 0.0
    %427 = vmatprep.subr.mxu0 0.0
    %428 = vmatpush2.msra.mxu0 0.0
    %429 = vmatprep.subr.mxu0 0.0
    %430 = vmatpush2.msra.mxu0 0.0
    %431 = vmatprep.subr.mxu0 0.0
    %432 = vmatpush2.msra.mxu0 0.0
    %433 = vmatprep.mubr.f32.mxu0 0.0
    %434 = vmatmul.mubr.f32.gmra.mxu0 %v239
    %v435 = vpop.f32.mrf.mxu0
    %v436 = vadd.f32 0.0, %v435
    %v437 = vpop.f32.mrf.mxu0
    %v438 = vadd.f32 0.0, %v437
    %439 = vmatprep.mubr.f32.mxu0 0.0
    %440 = vmatmul.mubr.f32.gmra.mxu0 %v240
    %v441 = vpop.f32.mrf.mxu0
    %v442 = vadd.f32 0.0, %v441
    %v443 = vpop.f32.mrf.mxu0
    %v444 = vadd.f32 0.0, %v443
    %445 = vmatprep.mubr.f32.mxu0 0.0
    %446 = vmatmul.mubr.f32.gmra.mxu0 %v241
    %v447 = vpop.f32.mrf.mxu0
    %v448 = vadd.f32 0.0, %v447
    %v449 = vpop.f32.mrf.mxu0
    %v450 = vadd.f32 0.0, %v449
    %451 = vmatprep.mubr.f32.mxu0 0.0
    %452 = vmatmul.mubr.f32.gmra.mxu0 %v242
    %v453 = vpop.f32.mrf.mxu0
    %v454 = vadd.f32 0.0, %v453
    %v455 = vpop.f32.mrf.mxu0
    %v456 = vadd.f32 0.0, %v455
    %457 = vmatprep.mubr.f32.mxu0 0.0
    %458 = vmatmul.mubr.f32.gmra.mxu0 %v243
    %v459 = vpop.f32.mrf.mxu0
    %v460 = vadd.f32 0.0, %v459
    %v461 = vpop.f32.mrf.mxu0
    %v462 = vadd.f32 0.0, %v461
    %463 = vmatprep.mubr.f32.mxu0 0.0
    %464 = vmatmul.mubr.f32.gmra.mxu0 %v244
    %v465 = vpop.f32.mrf.mxu0
    %v466 = vadd.f32 0.0, %v465
    %v467 = vpop.f32.mrf.mxu0
    %v468 = vadd.f32 0.0, %v467
    %469 = vmatprep.mubr.f32.mxu0 0.0
    %470 = vmatmul.mubr.f32.gmra.mxu0 %v245
    %v471 = vpop.f32.mrf.mxu0
    %v472 = vadd.f32 0.0, %v471
    %v473 = vpop.f32.mrf.mxu0
    %v474 = vadd.f32 0.0, %v473
    %475 = vmatprep.mubr.f32.mxu0 0.0
    %476 = vmatmul.mubr.f32.gmra.mxu0 %v246
    %v477 = vpop.f32.mrf.mxu0
    %v478 = vadd.f32 0.0, %v477
    %v479 = vpop.f32.mrf.mxu0
    %v480 = vadd.f32 0.0, %v479
    %481 = vdwg.mxu0
    %v482 = vlaneseq
    %v483 = vshrl.u32 %v482, 7
    %v484 = vsub.s32 2, %v483
    %v485 = vrot.slane %v80, %v484
    %v486 = vadd.f32 %v436, %v485
    %v487 = vadd.f32 %v442, %v485
    %v488 = vadd.f32 %v448, %v485
    %v489 = vadd.f32 %v454, %v485
    %v490 = vadd.f32 %v460, %v485
    %v491 = vadd.f32 %v466, %v485
    %v492 = vadd.f32 %v472, %v485
    %v493 = vadd.f32 %v478, %v485
    %v494 = vlaneseq
    %v495 = vshrl.u32 %v494, 7
    %v496 = vsub.s32 3, %v495
    %v497 = vrot.slane %v80, %v496
    %v498 = vadd.f32 %v438, %v497
    %v499 = vadd.f32 %v444, %v497
    %v500 = vadd.f32 %v450, %v497
    %v501 = vadd.f32 %v456, %v497
    %v502 = vadd.f32 %v462, %v497
    %v503 = vadd.f32 %v468, %v497
    %v504 = vadd.f32 %v474, %v497
    %v505 = vadd.f32 %v480, %v497
    %v507 = vcombine.high %v334, %v334
    %v509 = vunpack.c.l.s4 1966171168
    %v510 = vunpack.c.0.s8 %v509
    %v511 = vlaneseq
    %v512 = vshrl.u32 %v511, 7
    %v513 = vsub.s32 %v510, %v512
    %v514 = vrot.slane %v334, %v513
    %v516 = vunpack.c.l.s4 1966171168
    %v517 = vunpack.c.0.s8 %v516
    %v518 = vlaneseq
    %v519 = vshrl.u32 %v518, 7
    %v520 = vsub.s32 %v517, %v519
    %v521 = vrot.slane %v507, %v520
    %v522 = vcombine.high %v514, %v514
    %v523 = vcombine.high %v521, %v521
    %v525 = vunpack.c.l.s4 1966171168
    %v526 = vunpack.c.0.s8 %v525
    %v527 = vlaneseq
    %v528 = vshrl.u32 %v527, 7
    %v529 = vsub.s32 %v526, %v528
    %v530 = vrot.slane %v514, %v529
    %v532 = vunpack.c.l.s4 1966171168
    %v533 = vunpack.c.0.s8 %v532
    %v534 = vlaneseq
    %v535 = vshrl.u32 %v534, 7
    %v536 = vsub.s32 %v533, %v535
    %v537 = vrot.slane %v521, %v536
    %v539 = vunpack.c.l.s4 1966171168
    %v540 = vunpack.c.0.s8 %v539
    %v541 = vlaneseq
    %v542 = vshrl.u32 %v541, 7
    %v543 = vsub.s32 %v540, %v542
    %v544 = vrot.slane %v522, %v543
    %v546 = vunpack.c.l.s4 1966171168
    %v547 = vunpack.c.0.s8 %v546
    %v548 = vlaneseq
    %v549 = vshrl.u32 %v548, 7
    %v550 = vsub.s32 %v547, %v549
    %v551 = vrot.slane %v523, %v550
    %v552 = vcombine.high %v530, %v530
    %v553 = vcombine.high %v537, %v537
    %v554 = vcombine.high %v544, %v544
    %v555 = vcombine.high %v551, %v551
    %v556 = vlaneseq
    %v557 = vshrl.u32 %v556, 7
    %v558 = vsub.s32 0, %v557
    %v559 = vrot.slane %v530, %v558
    %v560 = vlaneseq
    %v561 = vshrl.u32 %v560, 7
    %v562 = vsub.s32 0, %v561
    %v563 = vrot.slane %v544, %v562
    %v564 = vlaneseq
    %v565 = vshrl.u32 %v564, 7
    %v566 = vsub.s32 0, %v565
    %v567 = vrot.slane %v552, %v566
    %v568 = vlaneseq
    %v569 = vshrl.u32 %v568, 7
    %v570 = vsub.s32 0, %v569
    %v571 = vrot.slane %v554, %v570
    %v572 = vlaneseq
    %v573 = vshrl.u32 %v572, 7
    %v574 = vsub.s32 0, %v573
    %v575 = vrot.slane %v537, %v574
    %v576 = vlaneseq
    %v577 = vshrl.u32 %v576, 7
    %v578 = vsub.s32 0, %v577
    %v579 = vrot.slane %v551, %v578
    %v580 = vlaneseq
    %v581 = vshrl.u32 %v580, 7
    %v582 = vsub.s32 0, %v581
    %v583 = vrot.slane %v553, %v582
    %v584 = vlaneseq
    %v585 = vshrl.u32 %v584, 7
    %v586 = vsub.s32 0, %v585
    %v587 = vrot.slane %v555, %v586
    %v596 = vmul.f32 %v486, %v559
    %v597 = vmul.f32 %v487, %v563
    %v598 = vmul.f32 %v488, %v567
    %v599 = vmul.f32 %v489, %v571
    %v600 = vmul.f32 %v490, %v575
    %v601 = vmul.f32 %v491, %v579
    %v602 = vmul.f32 %v492, %v583
    %v603 = vmul.f32 %v493, %v587
    %v604 = vld [vmem:[%s5] sm:$0xff]
    %v605 = vld [vmem:[%s5 + $0x8] sm:$0xff]
    %v606 = vld [vmem:[%s5 + $0x10] sm:$0xff]
    %v607 = vld [vmem:[%s5 + $0x18] sm:$0xff]
    %v608 = vld [vmem:[%s5 + $0x20] sm:$0xff]
    %v609 = vld [vmem:[%s5 + $0x28] sm:$0xff]
    %v610 = vld [vmem:[%s5 + $0x30] sm:$0xff]
    %v611 = vld [vmem:[%s5 + $0x38] sm:$0xff]
    %v612 = vld [vmem:[%s5 + $0x40] sm:$0xff]
    %v613 = vld [vmem:[%s5 + $0x48] sm:$0xff]
    %v614 = vld [vmem:[%s5 + $0x50] sm:$0xff]
    %v615 = vld [vmem:[%s5 + $0x58] sm:$0xff]
    %v616 = vld [vmem:[%s5 + $0x60] sm:$0xff]
    %v617 = vld [vmem:[%s5 + $0x68] sm:$0xff]
    %v618 = vld [vmem:[%s5 + $0x70] sm:$0xff]
    %v619 = vld [vmem:[%s5 + $0x78] sm:$0xff]
    %620 = vmatprep.subr.mxu0 0.0
    %621 = vmatpush1.msra.mxu0 %v619
    %622 = vmatprep.subr.mxu0 0.0
    %623 = vmatpush1.msra.mxu0 %v618
    %624 = vmatprep.subr.mxu0 0.0
    %625 = vmatpush1.msra.mxu0 %v617
    %626 = vmatprep.subr.mxu0 0.0
    %627 = vmatpush1.msra.mxu0 %v616
    %628 = vmatprep.subr.mxu0 0.0
    %629 = vmatpush1.msra.mxu0 %v615
    %630 = vmatprep.subr.mxu0 0.0
    %631 = vmatpush1.msra.mxu0 %v614
    %632 = vmatprep.subr.mxu0 0.0
    %633 = vmatpush1.msra.mxu0 %v613
    %634 = vmatprep.subr.mxu0 0.0
    %635 = vmatpush1.msra.mxu0 %v612
    %636 = vmatprep.subr.mxu0 0.0
    %637 = vmatpush1.msra.mxu0 %v611
    %638 = vmatprep.subr.mxu0 0.0
    %639 = vmatpush1.msra.mxu0 %v610
    %640 = vmatprep.subr.mxu0 0.0
    %641 = vmatpush1.msra.mxu0 %v609
    %642 = vmatprep.subr.mxu0 0.0
    %643 = vmatpush1.msra.mxu0 %v608
    %644 = vmatprep.subr.mxu0 0.0
    %645 = vmatpush1.msra.mxu0 %v607
    %646 = vmatprep.subr.mxu0 0.0
    %647 = vmatpush1.msra.mxu0 %v606
    %648 = vmatprep.subr.mxu0 0.0
    %649 = vmatpush1.msra.mxu0 %v605
    %650 = vmatprep.subr.mxu0 0.0
    %651 = vmatpush1.msra.mxu0 %v604
    %652 = vmatprep.subr.mxu0 0.0
    %653 = vmatpush2.msra.mxu0 0.0
    %654 = vmatprep.subr.mxu0 0.0
    %655 = vmatpush2.msra.mxu0 0.0
    %656 = vmatprep.subr.mxu0 0.0
    %657 = vmatpush2.msra.mxu0 0.0
    %658 = vmatprep.subr.mxu0 0.0
    %659 = vmatpush2.msra.mxu0 0.0
    %660 = vmatprep.subr.mxu0 0.0
    %661 = vmatpush2.msra.mxu0 0.0
    %662 = vmatprep.subr.mxu0 0.0
    %663 = vmatpush2.msra.mxu0 0.0
    %664 = vmatprep.subr.mxu0 0.0
    %665 = vmatpush2.msra.mxu0 0.0
    %666 = vmatprep.subr.mxu0 0.0
    %667 = vmatpush2.msra.mxu0 0.0
    %668 = vmatprep.subr.mxu0 0.0
    %669 = vmatpush2.msra.mxu0 0.0
    %670 = vmatprep.subr.mxu0 0.0
    %671 = vmatpush2.msra.mxu0 0.0
    %672 = vmatprep.subr.mxu0 0.0
    %673 = vmatpush2.msra.mxu0 0.0
    %674 = vmatprep.subr.mxu0 0.0
    %675 = vmatpush2.msra.mxu0 0.0
    %676 = vmatprep.subr.mxu0 0.0
    %677 = vmatpush2.msra.mxu0 0.0
    %678 = vmatprep.subr.mxu0 0.0
    %679 = vmatpush2.msra.mxu0 0.0
    %680 = vmatprep.subr.mxu0 0.0
    %681 = vmatpush2.msra.mxu0 0.0
    %682 = vmatprep.subr.mxu0 0.0
    %683 = vmatpush2.msra.mxu0 0.0
    %684 = vmatprep.mubr.f32.mxu0 0.0
    %685 = vmatmul.mubr.f32.gmra.mxu0 %v596
    %v686 = vpop.f32.mrf.mxu0
    %v687 = vadd.f32 0.0, %v686
    %v688 = vpop.f32.mrf.mxu0
    %689 = vmatprep.mubr.f32.mxu0 0.0
    %690 = vmatmul.mubr.f32.gmra.mxu0 %v597
    %v691 = vpop.f32.mrf.mxu0
    %v692 = vadd.f32 0.0, %v691
    %v693 = vpop.f32.mrf.mxu0
    %694 = vmatprep.mubr.f32.mxu0 0.0
    %695 = vmatmul.mubr.f32.gmra.mxu0 %v598
    %v696 = vpop.f32.mrf.mxu0
    %v697 = vadd.f32 0.0, %v696
    %v698 = vpop.f32.mrf.mxu0
    %699 = vmatprep.mubr.f32.mxu0 0.0
    %700 = vmatmul.mubr.f32.gmra.mxu0 %v599
    %v701 = vpop.f32.mrf.mxu0
    %v702 = vadd.f32 0.0, %v701
    %v703 = vpop.f32.mrf.mxu0
    %704 = vmatprep.mubr.f32.mxu0 0.0
    %705 = vmatmul.mubr.f32.gmra.mxu0 %v600
    %v706 = vpop.f32.mrf.mxu0
    %v707 = vadd.f32 0.0, %v706
    %v708 = vpop.f32.mrf.mxu0
    %709 = vmatprep.mubr.f32.mxu0 0.0
    %710 = vmatmul.mubr.f32.gmra.mxu0 %v601
    %v711 = vpop.f32.mrf.mxu0
    %v712 = vadd.f32 0.0, %v711
    %v713 = vpop.f32.mrf.mxu0
    %714 = vmatprep.mubr.f32.mxu0 0.0
    %715 = vmatmul.mubr.f32.gmra.mxu0 %v602
    %v716 = vpop.f32.mrf.mxu0
    %v717 = vadd.f32 0.0, %v716
    %v718 = vpop.f32.mrf.mxu0
    %719 = vmatprep.mubr.f32.mxu0 0.0
    %720 = vmatmul.mubr.f32.gmra.mxu0 %v603
    %v721 = vpop.f32.mrf.mxu0
    %v722 = vadd.f32 0.0, %v721
    %v723 = vpop.f32.mrf.mxu0
    %724 = vdwg.mxu0
    %vm725 = vcmask 64512
    %v726 = vsel %vm725, %v687, -inf
    %v727 = vrot.slane %v726, 4
    %v728 = vmax.f32 %v726, %v727
    %v729 = vrot.slane %v728, 2
    %v730 = vmax.f32 %v728, %v729
    %v731 = vrot.slane %v730, 1
    %v732 = vmax.f32 %v730, %v731
    %v733 = vsel %vm725, %v692, -inf
    %v734 = vrot.slane %v733, 4
    %v735 = vmax.f32 %v733, %v734
    %v736 = vrot.slane %v735, 2
    %v737 = vmax.f32 %v735, %v736
    %v738 = vrot.slane %v737, 1
    %v739 = vmax.f32 %v737, %v738
    %v740 = vsel %vm725, %v697, -inf
    %v741 = vrot.slane %v740, 4
    %v742 = vmax.f32 %v740, %v741
    %v743 = vrot.slane %v742, 2
    %v744 = vmax.f32 %v742, %v743
    %v745 = vrot.slane %v744, 1
    %v746 = vmax.f32 %v744, %v745
    %v747 = vsel %vm725, %v702, -inf
    %v748 = vrot.slane %v747, 4
    %v749 = vmax.f32 %v747, %v748
    %v750 = vrot.slane %v749, 2
    %v751 = vmax.f32 %v749, %v750
    %v752 = vrot.slane %v751, 1
    %v753 = vmax.f32 %v751, %v752
    %v754 = vsel %vm725, %v707, -inf
    %v755 = vrot.slane %v754, 4
    %v756 = vmax.f32 %v754, %v755
    %v757 = vrot.slane %v756, 2
    %v758 = vmax.f32 %v756, %v757
    %v759 = vrot.slane %v758, 1
    %v760 = vmax.f32 %v758, %v759
    %v761 = vsel %vm725, %v712, -inf
    %v762 = vrot.slane %v761, 4
    %v763 = vmax.f32 %v761, %v762
    %v764 = vrot.slane %v763, 2
    %v765 = vmax.f32 %v763, %v764
    %v766 = vrot.slane %v765, 1
    %v767 = vmax.f32 %v765, %v766
    %v768 = vsel %vm725, %v717, -inf
    %v769 = vrot.slane %v768, 4
    %v770 = vmax.f32 %v768, %v769
    %v771 = vrot.slane %v770, 2
    %v772 = vmax.f32 %v770, %v771
    %v773 = vrot.slane %v772, 1
    %v774 = vmax.f32 %v772, %v773
    %v775 = vsel %vm725, %v722, -inf
    %v776 = vrot.slane %v775, 4
    %v777 = vmax.f32 %v775, %v776
    %v778 = vrot.slane %v777, 2
    %v779 = vmax.f32 %v777, %v778
    %v780 = vrot.slane %v779, 1
    %v781 = vmax.f32 %v779, %v780
    %v782 = vsub.f32 %v687, %v732
    %v783 = vsub.f32 %v692, %v739
    %v784 = vsub.f32 %v697, %v746
    %v785 = vsub.f32 %v702, %v753
    %v786 = vsub.f32 %v707, %v760
    %v787 = vsub.f32 %v712, %v767
    %v788 = vsub.f32 %v717, %v774
    %v789 = vsub.f32 %v722, %v781
    %v790 = vmul.f32 %v782, 1.442695
    %v791 = vpow.pop %v790
    %v792 = vmul.f32 %v783, 1.442695
    %v793 = vpow.pop %v792
    %v794 = vmul.f32 %v784, 1.442695
    %v795 = vpow.pop %v794
    %v796 = vmul.f32 %v785, 1.442695
    %v797 = vpow.pop %v796
    %v798 = vmul.f32 %v786, 1.442695
    %v799 = vpow.pop %v798
    %v800 = vmul.f32 %v787, 1.442695
    %v801 = vpow.pop %v800
    %v802 = vmul.f32 %v788, 1.442695
    %v803 = vpow.pop %v802
    %v804 = vmul.f32 %v789, 1.442695
    %v805 = vpow.pop %v804
    %v806 = vsel %vm725, %v791, 0.0
    %v807 = vrot.slane %v806, 4
    %v808 = vadd.f32 %v806, %v807
    %v809 = vrot.slane %v808, 2
    %v810 = vadd.f32 %v808, %v809
    %v811 = vrot.slane %v810, 1
    %v812 = vadd.f32 %v810, %v811
    %v813 = vsel %vm725, %v793, 0.0
    %v814 = vrot.slane %v813, 4
    %v815 = vadd.f32 %v813, %v814
    %v816 = vrot.slane %v815, 2
    %v817 = vadd.f32 %v815, %v816
    %v818 = vrot.slane %v817, 1
    %v819 = vadd.f32 %v817, %v818
    %v820 = vsel %vm725, %v795, 0.0
    %v821 = vrot.slane %v820, 4
    %v822 = vadd.f32 %v820, %v821
    %v823 = vrot.slane %v822, 2
    %v824 = vadd.f32 %v822, %v823
    %v825 = vrot.slane %v824, 1
    %v826 = vadd.f32 %v824, %v825
    %v827 = vsel %vm725, %v797, 0.0
    %v828 = vrot.slane %v827, 4
    %v829 = vadd.f32 %v827, %v828
    %v830 = vrot.slane %v829, 2
    %v831 = vadd.f32 %v829, %v830
    %v832 = vrot.slane %v831, 1
    %v833 = vadd.f32 %v831, %v832
    %v834 = vsel %vm725, %v799, 0.0
    %v835 = vrot.slane %v834, 4
    %v836 = vadd.f32 %v834, %v835
    %v837 = vrot.slane %v836, 2
    %v838 = vadd.f32 %v836, %v837
    %v839 = vrot.slane %v838, 1
    %v840 = vadd.f32 %v838, %v839
    %v841 = vsel %vm725, %v801, 0.0
    %v842 = vrot.slane %v841, 4
    %v843 = vadd.f32 %v841, %v842
    %v844 = vrot.slane %v843, 2
    %v845 = vadd.f32 %v843, %v844
    %v846 = vrot.slane %v845, 1
    %v847 = vadd.f32 %v845, %v846
    %v848 = vsel %vm725, %v803, 0.0
    %v849 = vrot.slane %v848, 4
    %v850 = vadd.f32 %v848, %v849
    %v851 = vrot.slane %v850, 2
    %v852 = vadd.f32 %v850, %v851
    %v853 = vrot.slane %v852, 1
    %v854 = vadd.f32 %v852, %v853
    %v855 = vsel %vm725, %v805, 0.0
    %v856 = vrot.slane %v855, 4
    %v857 = vadd.f32 %v855, %v856
    %v858 = vrot.slane %v857, 2
    %v859 = vadd.f32 %v857, %v858
    %v860 = vrot.slane %v859, 1
    %v861 = vadd.f32 %v859, %v860
    %v862 = vrcp.pop %v812
    %v863 = vrcp.pop %v819
    %v864 = vrcp.pop %v826
    %v865 = vrcp.pop %v833
    %v866 = vrcp.pop %v840
    %v867 = vrcp.pop %v847
    %v868 = vrcp.pop %v854
    %v869 = vrcp.pop %v861
    %v870 = vmul.f32 %v791, %v862
    %v871 = vmul.f32 %v793, %v863
    %v872 = vmul.f32 %v795, %v864
    %v873 = vmul.f32 %v797, %v865
    %v874 = vmul.f32 %v799, %v866
    %v875 = vmul.f32 %v801, %v867
    %v876 = vmul.f32 %v803, %v868
    %v877 = vmul.f32 %v805, %v869
    %v879 = vsel %vm725, %v870, 0
    %v882 = vsel %vm725, %v871, 0
    %v885 = vsel %vm725, %v872, 0
    %v888 = vsel %vm725, %v873, 0
    %v891 = vsel %vm725, %v874, 0
    %v894 = vsel %vm725, %v875, 0
    %v897 = vsel %vm725, %v876, 0
    %v900 = vsel %vm725, %v877, 0
    %902 = vmatprep.subr.mxu0 0.0
    %903 = vmatpush1.msra.mxu0 0.0
    %904 = vmatprep.subr.mxu0 0.0
    %905 = vmatpush1.msra.mxu0 0.0
    %906 = vmatprep.subr.mxu0 0.0
    %907 = vmatpush1.msra.mxu0 0.0
    %908 = vmatprep.subr.mxu0 0.0
    %909 = vmatpush1.msra.mxu0 0.0
    %910 = vmatprep.subr.mxu0 0.0
    %911 = vmatpush1.msra.mxu0 0.0
    %912 = vmatprep.subr.mxu0 0.0
    %913 = vmatpush1.msra.mxu0 0.0
    %914 = vmatprep.subr.mxu0 0.0
    %915 = vmatpush1.msra.mxu0 0.0
    %916 = vmatprep.subr.mxu0 0.0
    %917 = vmatpush1.msra.mxu0 0.0
    %918 = vmatprep.subr.mxu0 0.0
    %919 = vmatpush1.msra.mxu0 0.0
    %920 = vmatprep.subr.mxu0 0.0
    %921 = vmatpush1.msra.mxu0 0.0
    %922 = vmatprep.subr.mxu0 0.0
    %923 = vmatpush1.msra.mxu0 0.0
    %924 = vmatprep.subr.mxu0 0.0
    %925 = vmatpush1.msra.mxu0 0.0
    %926 = vmatprep.subr.mxu0 0.0
    %927 = vmatpush1.msra.mxu0 0.0
    %928 = vmatprep.subr.mxu0 0.0
    %929 = vmatpush1.msra.mxu0 0.0
    %930 = vmatprep.subr.mxu0 0.0
    %931 = vmatpush1.msra.mxu0 0.0
    %932 = vmatprep.subr.mxu0 0.0
    %933 = vmatpush1.msra.mxu0 %v79
    %934 = vmatprep.subr.mxu0 0.0
    %935 = vmatpush2.msra.mxu0 0.0
    %936 = vmatprep.subr.mxu0 0.0
    %937 = vmatpush2.msra.mxu0 0.0
    %938 = vmatprep.subr.mxu0 0.0
    %939 = vmatpush2.msra.mxu0 0.0
    %940 = vmatprep.subr.mxu0 0.0
    %941 = vmatpush2.msra.mxu0 0.0
    %942 = vmatprep.subr.mxu0 0.0
    %943 = vmatpush2.msra.mxu0 0.0
    %944 = vmatprep.subr.mxu0 0.0
    %945 = vmatpush2.msra.mxu0 0.0
    %946 = vmatprep.subr.mxu0 0.0
    %947 = vmatpush2.msra.mxu0 0.0
    %948 = vmatprep.subr.mxu0 0.0
    %949 = vmatpush2.msra.mxu0 0.0
    %950 = vmatprep.subr.mxu0 0.0
    %951 = vmatpush2.msra.mxu0 0.0
    %952 = vmatprep.subr.mxu0 0.0
    %953 = vmatpush2.msra.mxu0 0.0
    %954 = vmatprep.subr.mxu0 0.0
    %955 = vmatpush2.msra.mxu0 0.0
    %956 = vmatprep.subr.mxu0 0.0
    %957 = vmatpush2.msra.mxu0 0.0
    %958 = vmatprep.subr.mxu0 0.0
    %959 = vmatpush2.msra.mxu0 0.0
    %960 = vmatprep.subr.mxu0 0.0
    %961 = vmatpush2.msra.mxu0 0.0
    %962 = vmatprep.subr.mxu0 0.0
    %963 = vmatpush2.msra.mxu0 0.0
    %964 = vmatprep.subr.mxu0 0.0
    %965 = vmatpush2.msra.mxu0 0.0
    %966 = vmatprep.mubr.f32.mxu0 0.0
    %967 = vmatmul.mubr.f32.gmra.mxu0 %v879
    %v968 = vpop.f32.mrf.mxu0
    %v969 = vadd.f32 0.0, %v968
    %v970 = vpop.f32.mrf.mxu0
    %971 = vmatprep.mubr.f32.mxu0 0.0
    %972 = vmatmul.mubr.f32.gmra.mxu0 %v882
    %v973 = vpop.f32.mrf.mxu0
    %v974 = vadd.f32 0.0, %v973
    %v975 = vpop.f32.mrf.mxu0
    %976 = vmatprep.mubr.f32.mxu0 0.0
    %977 = vmatmul.mubr.f32.gmra.mxu0 %v885
    %v978 = vpop.f32.mrf.mxu0
    %v979 = vadd.f32 0.0, %v978
    %v980 = vpop.f32.mrf.mxu0
    %981 = vmatprep.mubr.f32.mxu0 0.0
    %982 = vmatmul.mubr.f32.gmra.mxu0 %v888
    %v983 = vpop.f32.mrf.mxu0
    %v984 = vadd.f32 0.0, %v983
    %v985 = vpop.f32.mrf.mxu0
    %986 = vmatprep.mubr.f32.mxu0 0.0
    %987 = vmatmul.mubr.f32.gmra.mxu0 %v891
    %v988 = vpop.f32.mrf.mxu0
    %v989 = vadd.f32 0.0, %v988
    %v990 = vpop.f32.mrf.mxu0
    %991 = vmatprep.mubr.f32.mxu0 0.0
    %992 = vmatmul.mubr.f32.gmra.mxu0 %v894
    %v993 = vpop.f32.mrf.mxu0
    %v994 = vadd.f32 0.0, %v993
    %v995 = vpop.f32.mrf.mxu0
    %996 = vmatprep.mubr.f32.mxu0 0.0
    %997 = vmatmul.mubr.f32.gmra.mxu0 %v897
    %v998 = vpop.f32.mrf.mxu0
    %v999 = vadd.f32 0.0, %v998
    %v1000 = vpop.f32.mrf.mxu0
    %1001 = vmatprep.mubr.f32.mxu0 0.0
    %1002 = vmatmul.mubr.f32.gmra.mxu0 %v900
    %v1003 = vpop.f32.mrf.mxu0
    %v1004 = vadd.f32 0.0, %v1003
    %v1005 = vpop.f32.mrf.mxu0
    %1006 = vdwg.mxu0
    %v1007 = vmul.f32 %v498, %v969
    %v1008 = vmul.f32 %v499, %v974
    %v1009 = vmul.f32 %v500, %v979
    %v1010 = vmul.f32 %v501, %v984
    %v1011 = vmul.f32 %v502, %v989
    %v1012 = vmul.f32 %v503, %v994
    %v1013 = vmul.f32 %v504, %v999
    %v1014 = vmul.f32 %v505, %v1004
    %vm1015 = vcmp.gt.f32.partialorder %v1007, 0.0
    %vm1016 = vcmp.gt.f32.partialorder %v1008, 0.0
    %vm1017 = vcmp.gt.f32.partialorder %v1009, 0.0
    %vm1018 = vcmp.gt.f32.partialorder %v1010, 0.0
    %vm1019 = vcmp.gt.f32.partialorder %v1011, 0.0
    %vm1020 = vcmp.gt.f32.partialorder %v1012, 0.0
    %vm1021 = vcmp.gt.f32.partialorder %v1013, 0.0
    %vm1022 = vcmp.gt.f32.partialorder %v1014, 0.0
    %v1023 = vmul.f32 %v1007, 0.2
    %v1024 = vmul.f32 %v1008, 0.2
    %v1025 = vmul.f32 %v1009, 0.2
    %v1026 = vmul.f32 %v1010, 0.2
    %v1027 = vmul.f32 %v1011, 0.2
    %v1028 = vmul.f32 %v1012, 0.2
    %v1029 = vmul.f32 %v1013, 0.2
    %v1030 = vmul.f32 %v1014, 0.2
    %v1031 = vsel %vm1015, %v1007, %v1023
    %v1032 = vsel %vm1016, %v1008, %v1024
    %v1033 = vsel %vm1017, %v1009, %v1025
    %v1034 = vsel %vm1018, %v1010, %v1026
    %v1035 = vsel %vm1019, %v1011, %v1027
    %v1036 = vsel %vm1020, %v1012, %v1028
    %v1037 = vsel %vm1021, %v1013, %v1029
    %v1038 = vsel %vm1022, %v1014, %v1030
    %v1039 = vrot.slane %v1031, 4
    %v1040 = vadd.f32 %v1031, %v1039
    %v1041 = vrot.slane %v1040, 2
    %v1042 = vadd.f32 %v1040, %v1041
    %v1043 = vrot.slane %v1042, 1
    %v1044 = vadd.f32 %v1042, %v1043
    %v1045 = vrot.slane %v1032, 4
    %v1046 = vadd.f32 %v1032, %v1045
    %v1047 = vrot.slane %v1046, 2
    %v1048 = vadd.f32 %v1046, %v1047
    %v1049 = vrot.slane %v1048, 1
    %v1050 = vadd.f32 %v1048, %v1049
    %v1051 = vrot.slane %v1033, 4
    %v1052 = vadd.f32 %v1033, %v1051
    %v1053 = vrot.slane %v1052, 2
    %v1054 = vadd.f32 %v1052, %v1053
    %v1055 = vrot.slane %v1054, 1
    %v1056 = vadd.f32 %v1054, %v1055
    %v1057 = vrot.slane %v1034, 4
    %v1058 = vadd.f32 %v1034, %v1057
    %v1059 = vrot.slane %v1058, 2
    %v1060 = vadd.f32 %v1058, %v1059
    %v1061 = vrot.slane %v1060, 1
    %v1062 = vadd.f32 %v1060, %v1061
    %v1063 = vrot.slane %v1035, 4
    %v1064 = vadd.f32 %v1035, %v1063
    %v1065 = vrot.slane %v1064, 2
    %v1066 = vadd.f32 %v1064, %v1065
    %v1067 = vrot.slane %v1066, 1
    %v1068 = vadd.f32 %v1066, %v1067
    %v1069 = vrot.slane %v1036, 4
    %v1070 = vadd.f32 %v1036, %v1069
    %v1071 = vrot.slane %v1070, 2
    %v1072 = vadd.f32 %v1070, %v1071
    %v1073 = vrot.slane %v1072, 1
    %v1074 = vadd.f32 %v1072, %v1073
    %v1075 = vrot.slane %v1037, 4
    %v1076 = vadd.f32 %v1037, %v1075
    %v1077 = vrot.slane %v1076, 2
    %v1078 = vadd.f32 %v1076, %v1077
    %v1079 = vrot.slane %v1078, 1
    %v1080 = vadd.f32 %v1078, %v1079
    %v1081 = vrot.slane %v1038, 4
    %v1082 = vadd.f32 %v1038, %v1081
    %v1083 = vrot.slane %v1082, 2
    %v1084 = vadd.f32 %v1082, %v1083
    %v1085 = vrot.slane %v1084, 1
    %v1086 = vadd.f32 %v1084, %v1085
    %vm1095 = vcmask 1041409
    %v1096 = vsel %vm1095, %v1050, %v1044
    %vm1097 = vcmask 1042434
    %v1098 = vsel %vm1097, %v1056, %v1096
    %vm1099 = vcmask 1043459
    %v1100 = vsel %vm1099, %v1062, %v1098
    %vm1101 = vcmask 1044484
    %v1102 = vsel %vm1101, %v1068, %v1100
    %vm1103 = vcmask 1045509
    %v1104 = vsel %vm1103, %v1074, %v1102
    %vm1105 = vcmask 1046534
    %v1106 = vsel %vm1105, %v1080, %v1104
    %vm1107 = vcmask 1047559
    %v1108 = vsel %vm1107, %v1086, %v1106
    %v1110 = vadd.f32 %v238, %v1108
    %v1111 = vmul.f32 %v1110, 0.5
    %1112 = vst [vmem:[#allocation10] sm:$0xff] %v1111
    // Predicated region
    $region42: #{tpu_custom_call.1} parent=1 // pred_check
      _
    $region43: #{tpu_custom_call.1} parent=1 // pred_check_branch
      %1114 = sbr.rel (0) target = $region45
    $region44: #{tpu_custom_call.1} parent=1 // pred_region
      %s1116 = ssub.s32 128, 128
      %1117 = vsyncadd [#allocation4], %s1116
      %s1119 = sshll.u32 [#allocation10], 4
      %s1120 = int_to_ptr.vmem [resolvable:$true] %s1119
      %1122 = dma.vmem_to_hbm [thread:$0]  %s1120, 128, %s6, [#allocation4]
    $region45: #{tpu_custom_call.1} parent=1 // pred_fallthru
      _
    // Predicated region
    $region46: #{tpu_custom_call.1} parent=1 // pred_check
      _
    $region47: #{tpu_custom_call.1} parent=1 // pred_check_branch
      %1124 = sbr.rel (0) target = $region49
    $region48: #{tpu_custom_call.1} parent=1 // pred_region
      %1125 = dma.done [#allocation4], 128
    $region49: #{tpu_custom_call.1} parent=1 // pred_fallthru
      _
    %1126 = vsyncpa [#allocation3], 1
    %1127 = vsyncpa [#allocation6], 1
    %1128 = vsyncpa [#allocation9], 1
    %1129 = vsyncpa [#allocation4], 1

</llo_original>
